<compile_context>
chip_gen: v7x
topology: tpu7x:2x2x1
jax: 0.10.0
libtpu: 0.0.40
codegen_flags: <defaults>
</compile_context>

<pallas_src>
import functools

import jax
import jax.numpy as jnp
from jax.experimental import pallas as pl
from jax.experimental.pallas import tpu as pltpu

LANE = 128


def _round_up(a, b):
    return ((a + b - 1) // b) * b


def _swish_kernel(x_ref, o_ref, *, upcast):
    x = x_ref[...]
    if upcast:
        x = x.astype(jnp.float32)
    # swish(x) = x * sigmoid(x) = h + h*tanh(h) with h = x/2
    # (single EUP transcendental; one fewer vmul than x*(0.5*tanh(0.5x)+0.5)).
    h = x * 0.5
    o_ref[...] = (h + h * jnp.tanh(h)).astype(o_ref.dtype)


def _device_block_defaults():
    """Per-generation (block_bytes, vmem_limit_bytes, min_grid_steps, is_v5e)."""
    kind = ""
    try:
        kind = jax.devices()[0].device_kind.lower()
    except Exception:
        pass
    if "v5e" in kind or "v5 lite" in kind or "v5litepod" in kind:
        # v5e: ~0.8 TB/s HBM, 128 MiB physical VMEM -> 6 MiB blocks
        # (4 double-buffered copies = 24 MiB; raise scoped limit to 32 MiB).
        return 6 * 1024 * 1024, 32 * 1024 * 1024, 1, True
    if "v7" in kind:
        # v7x: ~3.2 TB/s HBM per TC but only 64 MiB VMEM -> 10 MiB blocks
        # (4 copies = 40 MiB) and at least 2 (even) grid steps so the
        # "parallel" axis gives both TensorCores equal work.
        return 10 * 1024 * 1024, 44 * 1024 * 1024, 2, False
    if "v6" in kind:
        # v6e: already ~85% of roofline at 1-4 MiB blocks; 8 MiB is free
        # headroom-wise (128 MiB physical VMEM) and shaves per-step overhead.
        return 8 * 1024 * 1024, 40 * 1024 * 1024, 1, False
    # v5p / v4 / unknown: high-BW HBM, 128 MiB VMEM, possible megacore.
    return 8 * 1024 * 1024, 40 * 1024 * 1024, 2, False


def swish(x, *, tile_rows=None):
    """Elementwise swish on an arbitrary-shaped array via a Pallas TPU kernel."""
    orig_shape = x.shape
    dtype = x.dtype
    n = x.size
    if n == 0:
        return x

    itemsize = jnp.dtype(dtype).itemsize
    # dtype-aware sublane packing: f32 -> 8, bf16/f16 -> 16, int8/fp8 -> 32
    sub = {4: 8, 2: 16, 1: 32}.get(itemsize, 8)

    target_bytes, vmem_limit, min_grid, is_v5e = _device_block_defaults()
    # bf16 has native VALU/EUP support on v6e/v7x; keep f32 compute on v5e.
    upcast = not (dtype == jnp.bfloat16 and not is_v5e)
    kernel = functools.partial(_swish_kernel, upcast=upcast)
    cparams = pltpu.CompilerParams(
        dimension_semantics=("parallel",),
        vmem_limit_bytes=vmem_limit,
    )

    if n % LANE != 0:
        # Ragged path: run on the flat 1-D array with a block that is a
        # multiple of (sublane * 128) elements; Pallas masks the partial last
        # block.  No jnp.pad / output slice -> no extra HBM passes.
        flat = jnp.reshape(x, (-1,))
        unit = sub * LANE
        block = max(unit, (target_bytes // itemsize) // unit * unit)
        if block >= n:
            block = n  # single full-array block (always a legal block shape)
        grid = (pl.cdiv(n, block),)
        out = pl.pallas_call(
            kernel,
            out_shape=jax.ShapeDtypeStruct((n,), dtype),
            grid=grid,
            in_specs=[pl.BlockSpec((block,), lambda i: (i,))],
            out_specs=pl.BlockSpec((block,), lambda i: (i,)),
            compiler_params=cparams,
        )(flat)
        return jnp.reshape(out, orig_shape)

    # Aligned (common) path: lane-dense 2-D slab.  Use a wider last dim when
    # the element count allows it (fewer, wider unmasked vst rows per block).
    lanes = LANE
    for cand in (1024, 512):
        if n % cand == 0:
            lanes = cand
            break
    rows = n // lanes
    slab = jnp.reshape(x, (rows, lanes))  # contiguous reshape: no HBM pass

    if tile_rows is None:
        tile_rows = max(sub, (target_bytes // (lanes * itemsize)) // sub * sub)
        if min_grid > 1:
            steps = pl.cdiv(rows, tile_rows)
            want = None
            if steps < min_grid and rows > min_grid * sub:
                want = min_grid            # force a split only if grid would be 1
            elif 1 < steps <= 16 and steps % 2 == 1:
                want = steps + 1           # even step count: equal work per TC
            if want is not None:
                tile_rows = max(sub, _round_up(pl.cdiv(rows, want), sub))
    if rows <= sub or tile_rows >= rows:
        tile_rows = rows                   # full-height block: always legal
    else:
        tile_rows = max(sub, _round_up(tile_rows, sub))  # sublane-pack aligned

    grid = (pl.cdiv(rows, tile_rows),)     # partial last block handled by masking

    out = pl.pallas_call(
        kernel,
        out_shape=jax.ShapeDtypeStruct((rows, lanes), dtype),
        grid=grid,
        in_specs=[pl.BlockSpec((tile_rows, lanes), lambda i: (i, 0))],
        out_specs=pl.BlockSpec((tile_rows, lanes), lambda i: (i, 0)),
        compiler_params=cparams,
    )(slab)

    return jnp.reshape(out, orig_shape)


if __name__ == "__main__":
    key = jax.random.PRNGKey(0)
    # Small NCHW input consistent with typical use of Swish in conv nets.
    x = jax.random.normal(key, (2, 4, 16, 16), dtype=jnp.float32)

    y = jax.block_until_ready(swish(x))

    # Reference check in plain JAX.
    ref = x * jax.nn.sigmoid(x)
    assert y.shape == x.shape and y.dtype == x.dtype
    assert jnp.max(jnp.abs(y - ref)) < 1e-5

    print("KERNEL_OK")
</pallas_src>

<mosaic_0001>
module attributes {stable_mosaic.version = 11 : i64} {
  func.func @_swish_kernel(%arg0: i32, %arg1: memref<2x1024xf32, #tpu.memory_space<vmem>>, %arg2: memref<2x1024xf32, #tpu.memory_space<vmem>>) attributes {dimension_semantics = [#tpu.dimension_semantics<parallel>], iteration_bounds = array<i64: 1>, scalar_prefetch = 0 : i64, scratch_operands = 0 : i64, tpu.core_type = #tpu.core_type<tc>, window_params = [{transform_indices = @transform_0, window_bounds = array<i64: 2, 1024>}, {transform_indices = @transform_1, window_bounds = array<i64: 2, 1024>}]} {
    %c0 = arith.constant 0 : index
    %c0_0 = arith.constant 0 : index
    %0 = vector.load %arg1[%c0, %c0_0] : memref<2x1024xf32, #tpu.memory_space<vmem>>, vector<2x1024xf32>
    %cst = arith.constant 5.000000e-01 : f32
    %1 = vector.broadcast %cst : f32 to vector<2x1024xf32>
    %2 = arith.mulf %0, %1 : vector<2x1024xf32>
    %3 = math.tanh %2 : vector<2x1024xf32>
    %4 = arith.mulf %2, %3 : vector<2x1024xf32>
    %5 = arith.addf %2, %4 : vector<2x1024xf32>
    %c0_1 = arith.constant 0 : index
    %c0_2 = arith.constant 0 : index
    %6 = vector.load %arg2[%c0_1, %c0_2] : memref<2x1024xf32, #tpu.memory_space<vmem>>, vector<2x1024xf32>
    tpu.vector_store %arg2[%c0_1, %c0_2], %5 {strides = array<i32>} : memref<2x1024xf32, #tpu.memory_space<vmem>>, vector<2x1024xf32>,
    return
  }
  func.func @transform_0(%arg0: i32) -> (i32, i32) {
    %c0_i32 = arith.constant 0 : i32
    %c0_i32_0 = arith.constant 0 : i32
    return %arg0, %c0_i32 : i32, i32
  }
  func.func @transform_1(%arg0: i32) -> (i32, i32) {
    %c0_i32 = arith.constant 0 : i32
    %c0_i32_0 = arith.constant 0 : i32
    return %arg0, %c0_i32 : i32, i32
  }
}

</mosaic_0001>

<llo_original>
// kernel: tpu_custom_call.1
$region0: #{tpu_custom_call.1}
  #allocation0 [shape = 'u32[]', space=smem, size = 0x4, offset = 0x4, fixed_abs, tag = 'smem constant byte address 0x4 - core index']
  #allocation1 [shape = 'u32[144,128]{1,0:T(1,128)}', space=vmem, size = 0x12000, scoped, tag = 'internal scratch']
  %s0 = inlined_call_operand.hbm [shape: f32[2,1024], index: 0, kind: input, shape index: {}]
  %s1 = inlined_call_operand.hbm [shape: f32[2,1024], index: 1, kind: output, shape index: {}]
  %s2 = sld [smem:[#allocation0]]
  $region18: #{tpu_custom_call.1} parent=0
    _
  %s4 = ssub.s32 1, %s2
  %s5 = scalar_select 0, %s4, %s2
  $region1: #{tpu_custom_call.1} parent=0
    #allocation2 [shape = 'u8[8192]{0}', space=vmem, size = 0x2000, scoped, tag = 'input window, operand 0, single buffered']
    #allocation3 [shape = 's32[1]{0}', space=sflag, size = 0x4, scoped, tag = 'scoped memory for tpu_custom_call.1']
    #allocation4 [shape = 's32[1]{0}', space=sflag, size = 0x4, scoped, tag = 'scoped memory for tpu_custom_call.1']
    #allocation5 [shape = 'u8[8192]{0}', space=vmem, size = 0x2000, scoped, tag = 'output window, operand 0, single buffered']
    %6 = vsyncpa [#allocation3], 0
    %7 = vsyncpa [#allocation4], 0
    // Predicated region
    $region2: #{tpu_custom_call.1} parent=1 // pred_check
      _
    $region3: #{tpu_custom_call.1} parent=1 // pred_check_branch
      %9 = sbr.rel (0) target = $region5
    $region4: #{tpu_custom_call.1} parent=1 // pred_region
      %s11 = ssub.s32 256, 256
      %12 = vsyncadd [#allocation3], %s11
      %s14 = sshll.u32 [#allocation2], 4
      %s15 = int_to_ptr.vmem [resolvable:$true] %s14
      %17 = dma.hbm_to_vmem [thread:$0]  %s0, 256, %s15, [#allocation3]
    $region5: #{tpu_custom_call.1} parent=1 // pred_fallthru
      _
    // Predicated region
    $region6: #{tpu_custom_call.1} parent=1 // pred_check
      _
    $region7: #{tpu_custom_call.1} parent=1 // pred_check_branch
      %19 = sbr.rel (0) target = $region9
    $region8: #{tpu_custom_call.1} parent=1 // pred_region
      %20 = dma.done [#allocation3], 256
    $region9: #{tpu_custom_call.1} parent=1 // pred_fallthru
      _
    %v21 = vld [vmem:[#allocation2] sm:$0xff]
    %v22 = vld [vmem:[#allocation2 + $0x8] sm:$0xff]
    %v23 = vmul.f32 %v21, 0.5
    %v24 = vmul.f32 %v22, 0.5
    %v25 = vtanh.pop %v23
    %v26 = vtanh.pop %v24
    %v27 = vmul.f32 %v23, %v25
    %v28 = vmul.f32 %v24, %v26
    %v29 = vadd.f32 %v23, %v27
    %v30 = vadd.f32 %v24, %v28
    %31 = vst [vmem:[#allocation5] sm:$0xff] %v29
    %32 = vst [vmem:[#allocation5 + $0x8] sm:$0xff] %v30
    // Predicated region
    $region10: #{tpu_custom_call.1} parent=1 // pred_check
      _
    $region11: #{tpu_custom_call.1} parent=1 // pred_check_branch
      %34 = sbr.rel (0) target = $region13
    $region12: #{tpu_custom_call.1} parent=1 // pred_region
      %s36 = ssub.s32 256, 256
      %37 = vsyncadd [#allocation4], %s36
      %s39 = sshll.u32 [#allocation5], 4
      %s40 = int_to_ptr.vmem [resolvable:$true] %s39
      %42 = dma.vmem_to_hbm [thread:$0]  %s40, 256, %s1, [#allocation4]
    $region13: #{tpu_custom_call.1} parent=1 // pred_fallthru
      _
    // Predicated region
    $region14: #{tpu_custom_call.1} parent=1 // pred_check
      _
    $region15: #{tpu_custom_call.1} parent=1 // pred_check_branch
      %44 = sbr.rel (0) target = $region17
    $region16: #{tpu_custom_call.1} parent=1 // pred_region
      %45 = dma.done [#allocation4], 256
    $region17: #{tpu_custom_call.1} parent=1 // pred_fallthru
      _
    %46 = vsyncpa [#allocation3], 1
    %47 = vsyncpa [#allocation4], 1

</llo_original>
